<compile_context>
chip_gen: v5e
topology: v5e:2x2
jax: 0.10.0
libtpu: 0.0.40
codegen_flags: <defaults>
</compile_context>

<pallas_src>
from functools import partial

import jax
import jax.numpy as jnp
from jax import lax
from jax.experimental import pallas as pl
from jax.experimental.pallas import tpu as pltpu


def _cdiv(a, b):
    return -(-a // b)


def _round_up(a, b):
    return _cdiv(a, b) * b


def _choose_block_b(batch, target=32768):
    """Pick the per-grid-step batch tile (multiple of 128).

    Small batches -> one tile covering the whole (padded) batch.
    Large batches -> ~target-sized tiles, with an even number of grid steps so the
    'parallel' batch axis keeps both v7x TensorCores busy.
    """
    b128 = _round_up(batch, 128)
    if b128 <= target:
        return b128
    n = _cdiv(batch, target)
    n = n + (n % 2)                      # even number of grid steps (>= 2)
    return _round_up(_cdiv(batch, n), 128)


def mlp_kernel(xT_ref, w1_ref, b1_ref, w2_ref, b2_ref, o_ref, *, lane_chunk):
    # xT: (D, TB)   w1: (H, D)   b1: (H, 1)   w2: (1, H)   b2: (1, 1) in SMEM
    # o : (1, TB)   -- batch on the lane axis everywhere.
    w1 = w1_ref[...]
    b1 = b1_ref[...]                     # (H, 1) broadcasts over lanes
    w2 = w2_ref[...]
    b2 = b2_ref[0, 0]                    # SMEM scalar

    n_chunks = o_ref.shape[-1] // lane_chunk

    def body(c, carry):
        off = pl.multiple_of(c * lane_chunk, 128)
        xc = xT_ref[:, pl.ds(off, lane_chunk)]                       # (D, chunk)

        # Hidden layer: h^T = W1 @ x^T + b1  -> (H, chunk).  Plain MXU push, no .T.
        hT = jnp.dot(w1, xc, preferred_element_type=jnp.float32) + b1

        # Sigmoid via single EUP transcendental: sigma(x) = 0.5*(tanh(x/2)+1).
        hT = 0.5 * (jnp.tanh(0.5 * hT) + 1.0)

        # Output layer: y^T = W2 @ h^T + b2 -> (1, chunk).
        yT = jnp.dot(w2, hT, preferred_element_type=jnp.float32) + b2

        o_ref[:, pl.ds(off, lane_chunk)] = yT.astype(o_ref.dtype)
        return carry

    # fori_loop (not a Python for) bounds hT's live range to one chunk of vregs.
    lax.fori_loop(0, n_chunks, body, 0, unroll=True)


@partial(jax.jit, static_argnames=("block_b", "lane_chunk"))
def mlp_forward(x, w1, b1, w2, b2, *, block_b=None, lane_chunk=2048):
    """Fused MLP forward.

    x : (B, D) inputs, w1 : (H, D), b1 : (H,), w2 : (1, H), b2 : (1,)
    Returns (B, 1), identical to the PyTorch module.

    block_b: per-grid-step batch tile (multiple of 128); None -> auto (target ~32K,
    even number of grid steps for v7x). lane_chunk: in-kernel lane slice bounding the
    hidden-activation live range (vreg pressure on v5e).
    """
    B, D = x.shape
    H = w1.shape[0]

    if block_b is None:
        block_b = _choose_block_b(B)
    n_blocks = _cdiv(B, block_b)
    b_pad = n_blocks * block_b

    chunk = lane_chunk if (block_b % lane_chunk == 0) else block_b

    # Layout plumbing: batch on the lane axis.  (If the sampler can emit x as (D, B)
    # directly, pass that in and drop this transpose for one less HBM pass over x.)
    xT = x.T                                           # (D, B)
    if b_pad != B:
        xT = jnp.pad(xT, ((0, 0), (0, b_pad - B)))     # pad only when needed
    b1_col = b1.reshape(H, 1)
    b2_2d = b2.reshape(1, 1)

    # Rough per-step VMEM footprint (sublane-padded, double-buffered I/O + hT chunk),
    # with 2x headroom, clamped to [32 MiB, 64 MiB] (v7x physical VMEM is 64 MiB).
    est = 4 * (2 * 8 * block_b            # xT tile, double-buffered, padded to 8 sublanes
               + 2 * 8 * block_b          # (1, TB) out tile, double-buffered, padded
               + chunk * max(H, 8)        # hT chunk (if spilled)
               + 4 * H * 128)             # weights / biases (padded), tiny
    vmem_limit = int(min(max(2 * est, 32 * 1024 * 1024), 64 * 1024 * 1024))

    out = pl.pallas_call(
        partial(mlp_kernel, lane_chunk=chunk),
        out_shape=jax.ShapeDtypeStruct((1, b_pad), x.dtype),
        grid=(n_blocks,),
        in_specs=[
            pl.BlockSpec((D, block_b), lambda i: (0, i)),        # x^T batch tile
            pl.BlockSpec((H, D), lambda i: (0, 0)),              # W1, VMEM-resident
            pl.BlockSpec((H, 1), lambda i: (0, 0)),              # b1 column, resident
            pl.BlockSpec((1, H), lambda i: (0, 0)),              # W2 row, resident
            pl.BlockSpec(memory_space=pltpu.MemorySpace.SMEM),   # b2 scalar in SMEM
        ],
        out_specs=pl.BlockSpec((1, block_b), lambda i: (0, i)),  # lane-dense store
        compiler_params=pltpu.CompilerParams(
            dimension_semantics=("parallel",),   # shard batch tiles across TCs (v7x)
            vmem_limit_bytes=vmem_limit,
        ),
    )(xT, w1, b1_col, w2, b2_2d)

    # Strip batch padding and restore the (B, 1) PyTorch output shape.
    return out[0, :B].reshape(B, 1)


def init_params(key, input_size, hidden_size, dtype=jnp.float32):
    """Deterministic init mimicking PyTorch nn.Linear defaults
    (uniform(-1/sqrt(fan_in), 1/sqrt(fan_in))).  Native PyTorch layouts:
    w1 [H, D], w2 [1, H]."""
    k1, k2, k3, k4 = jax.random.split(key, 4)
    bound1 = 1.0 / jnp.sqrt(jnp.array(input_size, dtype))
    bound2 = 1.0 / jnp.sqrt(jnp.array(hidden_size, dtype))
    w1 = jax.random.uniform(k1, (hidden_size, input_size), dtype, -bound1, bound1)
    b1 = jax.random.uniform(k2, (hidden_size,), dtype, -bound1, bound1)
    w2 = jax.random.uniform(k3, (1, hidden_size), dtype, -bound2, bound2)
    b2 = jax.random.uniform(k4, (1,), dtype, -bound2, bound2)
    return w1, b1, w2, b2


# TODO(synk): only the forward pass is implemented as a Pallas kernel; the module's
# training loop / optimizer / loss methods are host-side PyTorch logic, not kernel ops.

if __name__ == "__main__":
    input_size = 4      # number of integrand dimensions
    hidden_size = 32
    batch = 200         # not a multiple of 128: exercises batch padding

    key = jax.random.PRNGKey(0)
    kx, kp = jax.random.split(key)
    x = jax.random.uniform(kx, (batch, input_size), jnp.float32)
    w1, b1, w2, b2 = init_params(kp, input_size, hidden_size)

    # Pure-JAX reference (same math as the PyTorch module's forward()).
    y_ref = jax.nn.sigmoid(x @ w1.T + b1) @ w2.T + b2

    # 1) Auto-sized batch tile (single grid step at this small batch).
    out = mlp_forward(x, w1, b1, w2, b2)
    jax.block_until_ready(out)
    assert out.shape == (batch, 1)
    assert jnp.allclose(out, y_ref, atol=1e-4, rtol=1e-4)

    # 2) Forced small tile: exercises multiple grid steps + padding path.
    out_tiled = mlp_forward(x, w1, b1, w2, b2, block_b=128)
    jax.block_until_ready(out_tiled)
    assert jnp.allclose(out_tiled, y_ref, atol=1e-4, rtol=1e-4)

    print("KERNEL_OK")
</pallas_src>

<mosaic_0001>
module attributes {stable_mosaic.version = 11 : i64} {
  func.func @mlp_kernel(%arg0: i32, %arg1: memref<4x256xf32, #tpu.memory_space<vmem>>, %arg2: memref<32x4xf32, #tpu.memory_space<vmem>>, %arg3: memref<32x1xf32, #tpu.memory_space<vmem>>, %arg4: memref<1x32xf32, #tpu.memory_space<vmem>>, %arg5: memref<1x1xf32, #tpu.memory_space<smem>>, %arg6: memref<1x256xf32, #tpu.memory_space<vmem>>) attributes {dimension_semantics = [#tpu.dimension_semantics<parallel>], iteration_bounds = array<i64: 1>, scalar_prefetch = 0 : i64, scratch_operands = 0 : i64, tpu.core_type = #tpu.core_type<tc>, window_params = [{transform_indices = @transform_0, window_bounds = array<i64: 4, 256>}, {pipeline_mode = #tpu.pipeline_mode<synchronous>, transform_indices = @transform_1, window_bounds = array<i64: 32, 4>}, {pipeline_mode = #tpu.pipeline_mode<synchronous>, transform_indices = @transform_2, window_bounds = array<i64: 32, 1>}, {pipeline_mode = #tpu.pipeline_mode<synchronous>, transform_indices = @transform_3, window_bounds = array<i64: 1, 32>}, {transform_indices = @transform_4, window_bounds = array<i64: 1, 1>}, {transform_indices = @transform_5, window_bounds = array<i64: 1, 256>}]} {
    %c0 = arith.constant 0 : index
    %c0_0 = arith.constant 0 : index
    %0 = vector.load %arg2[%c0, %c0_0] : memref<32x4xf32, #tpu.memory_space<vmem>>, vector<32x4xf32>
    %c0_1 = arith.constant 0 : index
    %c0_2 = arith.constant 0 : index
    %1 = vector.load %arg3[%c0_1, %c0_2] : memref<32x1xf32, #tpu.memory_space<vmem>>, vector<32x1xf32>
    %c0_3 = arith.constant 0 : index
    %c0_4 = arith.constant 0 : index
    %2 = vector.load %arg4[%c0_3, %c0_4] : memref<1x32xf32, #tpu.memory_space<vmem>>, vector<1x32xf32>
    %c0_5 = arith.constant 0 : index
    %c0_6 = arith.constant 0 : index
    %3 = memref.load %arg5[%c0_5, %c0_6] : memref<1x1xf32, #tpu.memory_space<smem>>
    %c0_i32 = arith.constant 0 : i32
    %c256_i32 = arith.constant 256 : i32
    %4 = arith.muli %c0_i32, %c256_i32 : i32
    %5 = tpu.assume_multiple %4, 128 : i32
    %c0_7 = arith.constant 0 : index
    %6 = arith.index_cast %5 : i32 to index
    %7 = vector.load %arg1[%c0_7, %6] : memref<4x256xf32, #tpu.memory_space<vmem>>, vector<4x256xf32>
    %cst = arith.constant dense<0.000000e+00> : vector<32x256xf32>
    %8 = tpu.matmul %0, %7, %cst {dimension_numbers = #tpu.dot_dimension_numbers<[1], [0], [0], [1], [0, 0, 1, 1], [], []>} : vector<32x4xf32>, vector<4x256xf32>, vector<32x256xf32> -> vector<32x256xf32>
    %9 = vector.broadcast %1 : vector<32x1xf32> to vector<32x256xf32>
    %10 = arith.addf %8, %9 : vector<32x256xf32>
    %cst_8 = arith.constant 5.000000e-01 : f32
    %11 = vector.broadcast %cst_8 : f32 to vector<32x256xf32>
    %12 = arith.mulf %11, %10 : vector<32x256xf32>
    %13 = math.tanh %12 : vector<32x256xf32>
    %cst_9 = arith.constant 1.000000e+00 : f32
    %14 = vector.broadcast %cst_9 : f32 to vector<32x256xf32>
    %15 = arith.addf %13, %14 : vector<32x256xf32>
    %cst_10 = arith.constant 5.000000e-01 : f32
    %16 = vector.broadcast %cst_10 : f32 to vector<32x256xf32>
    %17 = arith.mulf %16, %15 : vector<32x256xf32>
    %cst_11 = arith.constant dense<0.000000e+00> : vector<1x256xf32>
    %18 = tpu.matmul %2, %17, %cst_11 {dimension_numbers = #tpu.dot_dimension_numbers<[1], [0], [0], [1], [0, 0, 1, 1], [], []>} : vector<1x32xf32>, vector<32x256xf32>, vector<1x256xf32> -> vector<1x256xf32>
    %19 = vector.broadcast %3 : f32 to vector<1x256xf32>
    %20 = arith.addf %18, %19 : vector<1x256xf32>
    %c0_12 = arith.constant 0 : index
    %21 = arith.index_cast %5 : i32 to index
    %22 = vector.load %arg6[%c0_12, %21] : memref<1x256xf32, #tpu.memory_space<vmem>>, vector<1x256xf32>
    tpu.vector_store %arg6[%c0_12, %21], %20 {strides = array<i32>} : memref<1x256xf32, #tpu.memory_space<vmem>>, vector<1x256xf32>,
    %c1_i32 = arith.constant 1 : i32
    return
  }
  func.func @transform_0(%arg0: i32) -> (i32, i32) {
    %c0_i32 = arith.constant 0 : i32
    %c0_i32_0 = arith.constant 0 : i32
    return %c0_i32, %arg0 : i32, i32
  }
  func.func @transform_1(%arg0: i32) -> (i32, i32) {
    %c0_i32 = arith.constant 0 : i32
    %c0_i32_0 = arith.constant 0 : i32
    %c0_i32_1 = arith.constant 0 : i32
    return %c0_i32, %c0_i32_0 : i32, i32
  }
  func.func @transform_2(%arg0: i32) -> (i32, i32) {
    %c0_i32 = arith.constant 0 : i32
    %c0_i32_0 = arith.constant 0 : i32
    %c0_i32_1 = arith.constant 0 : i32
    return %c0_i32, %c0_i32_0 : i32, i32
  }
  func.func @transform_3(%arg0: i32) -> (i32, i32) {
    %c0_i32 = arith.constant 0 : i32
    %c0_i32_0 = arith.constant 0 : i32
    %c0_i32_1 = arith.constant 0 : i32
    return %c0_i32, %c0_i32_0 : i32, i32
  }
  func.func @transform_4(%arg0: i32) -> (i32, i32) {
    %c0_i32 = arith.constant 0 : i32
    %c0_i32_0 = arith.constant 0 : i32
    %c0_i32_1 = arith.constant 0 : i32
    return %c0_i32, %c0_i32_0 : i32, i32
  }
  func.func @transform_5(%arg0: i32) -> (i32, i32) {
    %c0_i32 = arith.constant 0 : i32
    %c0_i32_0 = arith.constant 0 : i32
    return %c0_i32, %arg0 : i32, i32
  }
}

</mosaic_0001>

<llo_original>
// kernel: mlp_forward.1
$region0: #{mlp_forward.1}
  #allocation0 [shape = 'u32[]', space=smem, size = 0x4, offset = 0x4, fixed_abs, tag = 'smem constant byte address 0x4 - core index']
  #allocation1 [shape = 'u32[72,128]{1,0:T(1,128)}', space=vmem, size = 0x9000, scoped, tag = 'internal scratch']
  #allocation2 [shape = 'f32[1,1]{1,0:T(1,128)S(6)}', space=smem, size = 0x200, scoped, tag = 'scoped memory for mlp_forward.1']
  %s0 = inlined_call_operand.vmem [shape: f32[4,256], index: 0, kind: input, shape index: {}]
  %s1 = inlined_call_operand.vmem [shape: f32[32,4], index: 1, kind: input, shape index: {}]
  %s2 = inlined_call_operand.vmem [shape: f32[32,1], index: 2, kind: input, shape index: {}]
  %s3 = inlined_call_operand.vmem [shape: f32[1,32], index: 3, kind: input, shape index: {}]
  %s4 = inlined_call_operand.<no memory space> [shape: f32[1,1], index: 4, kind: input, shape index: {}]
  %s5 = inlined_call_operand.vmem [shape: f32[1,256], index: 5, kind: output, shape index: {}]
  %s6 = sld [smem:[#allocation0]]
  $region30: #{mlp_forward.1} parent=0
    _
  %s8 = ssub.s32 1, %s6
  %s9 = scalar_select 0, %s8, %s6
  %10 = sst [smem:[#allocation2]] %s4
  // Predicated region
  $region2: #{mlp_forward.1} parent=0 // pred_check
    _
  $region3: #{mlp_forward.1} parent=0 // pred_check_branch
    %12 = sbr.rel (0) target = $region5
  $region4: #{mlp_forward.1} parent=0 // pred_region
    _
  $region5: #{mlp_forward.1} parent=0 // pred_fallthru
    _
  // Predicated region
  $region6: #{mlp_forward.1} parent=0 // pred_check
    _
  $region7: #{mlp_forward.1} parent=0 // pred_check_branch
    %14 = sbr.rel (0) target = $region9
  $region8: #{mlp_forward.1} parent=0 // pred_region
    _
  $region9: #{mlp_forward.1} parent=0 // pred_fallthru
    _
  // Predicated region
  $region10: #{mlp_forward.1} parent=0 // pred_check
    _
  $region11: #{mlp_forward.1} parent=0 // pred_check_branch
    %16 = sbr.rel (0) target = $region13
  $region12: #{mlp_forward.1} parent=0 // pred_region
    _
  $region13: #{mlp_forward.1} parent=0 // pred_fallthru
    _
  // Predicated region
  $region14: #{mlp_forward.1} parent=0 // pred_check
    _
  $region15: #{mlp_forward.1} parent=0 // pred_check_branch
    %18 = sbr.rel (0) target = $region17
  $region16: #{mlp_forward.1} parent=0 // pred_region
    _
  $region17: #{mlp_forward.1} parent=0 // pred_fallthru
    _
  // Predicated region
  $region18: #{mlp_forward.1} parent=0 // pred_check
    _
  $region19: #{mlp_forward.1} parent=0 // pred_check_branch
    %20 = sbr.rel (0) target = $region21
  $region20: #{mlp_forward.1} parent=0 // pred_region
    _
  $region21: #{mlp_forward.1} parent=0 // pred_fallthru
    _
  %v21 = vld [vmem:[%s1] sm:$0xff]
  %v22 = vld [vmem:[%s1 + $0x8] sm:$0xff]
  %v23 = vld [vmem:[%s1 + $0x10] sm:$0xff]
  %v24 = vld [vmem:[%s1 + $0x18] sm:$0xff]
  %v25 = vld [vmem:[%s2] sm:$0xff]
  %v26 = vld [vmem:[%s2 + $0x8] sm:$0xff]
  %v27 = vld [vmem:[%s2 + $0x10] sm:$0xff]
  %v28 = vld [vmem:[%s2 + $0x18] sm:$0xff]
  %v29 = vld [vmem:[%s3] sm:$0x1]
  %s30 = sld [smem:[#allocation2]]
  %v31 = vld [vmem:[%s0] sm:$0xff]
  %33 = vset.pattern.permute.xlu0 0
  %34 = vperm.xlu0 %33, %v25
  %v35 = vpop.permute.xlu0 %34
  %38 = vset.pattern.permute.xlu0 0
  %39 = vperm.xlu0 %38, %v26
  %v40 = vpop.permute.xlu0 %39
  %43 = vset.pattern.permute.xlu0 0
  %44 = vperm.xlu0 %43, %v27
  %v45 = vpop.permute.xlu0 %44
  %48 = vset.pattern.permute.xlu0 0
  %49 = vperm.xlu0 %48, %v28
  %v50 = vpop.permute.xlu0 %49
  %53 = vst [vmem:[#allocation1] ss:$2 sm:$0xff] %v31
  %v54 = vld.sshfl [vmem:[#allocation1] sm:$0xff pattern:$0x75316420]
  %v55 = vld.sshfl [vmem:[#allocation1 + $0x8] sm:$0xff pattern:$0x75316420]
  %vm56 = vcmask 31744
  %v58 = vsel %vm56, %v21, 0
  %v61 = vsel %vm56, %v22, 0
  %v64 = vsel %vm56, %v23, 0
  %v67 = vsel %vm56, %v24, 0
  %vm69 = vcmask 1043456
  %v70 = vsel %vm69, %v54, 0
  %v72 = vsel %vm69, %v55, 0
  %74 = vmatpush.msra.mxu0 0.0
  %75 = vmatpush.msra.mxu0 0.0
  %76 = vmatpush.msra.mxu0 0.0
  %77 = vmatpush.msra.mxu0 0.0
  %78 = vmatpush.msra.mxu0 0.0
  %79 = vmatpush.msra.mxu0 0.0
  %80 = vmatpush.msra.mxu0 0.0
  %81 = vmatpush.msra.mxu0 0.0
  %82 = vmatpush.msra.mxu0 0.0
  %83 = vmatpush.msra.mxu0 0.0
  %84 = vmatpush.msra.mxu0 0.0
  %85 = vmatpush.msra.mxu0 0.0
  %86 = vmatpush.msra.mxu0 0.0
  %87 = vmatpush.msra.mxu0 0.0
  %88 = vmatpush.msra.mxu0 0.0
  %89 = vmatpush.msra.mxu0 %v70
  %90 = vmatmul.f32.gmra.mxu0 %v58
  %v91 = vpop.f32.mrf.mxu0
  %v92 = vadd.f32 %v35, %v91
  %93 = vmatmul.f32.gmra.mxu0 %v61
  %v94 = vpop.f32.mrf.mxu0
  %v95 = vadd.f32 %v40, %v94
  %96 = vmatmul.f32.gmra.mxu0 %v64
  %v97 = vpop.f32.mrf.mxu0
  %v98 = vadd.f32 %v45, %v97
  %99 = vmatmul.f32.gmra.mxu0 %v67
  %v100 = vpop.f32.mrf.mxu0
  %v101 = vadd.f32 %v50, %v100
  %102 = vdwg.mxu0
  %103 = vmatpush.msra.mxu0 0.0
  %104 = vmatpush.msra.mxu0 0.0
  %105 = vmatpush.msra.mxu0 0.0
  %106 = vmatpush.msra.mxu0 0.0
  %107 = vmatpush.msra.mxu0 0.0
  %108 = vmatpush.msra.mxu0 0.0
  %109 = vmatpush.msra.mxu0 0.0
  %110 = vmatpush.msra.mxu0 0.0
  %111 = vmatpush.msra.mxu0 0.0
  %112 = vmatpush.msra.mxu0 0.0
  %113 = vmatpush.msra.mxu0 0.0
  %114 = vmatpush.msra.mxu0 0.0
  %115 = vmatpush.msra.mxu0 0.0
  %116 = vmatpush.msra.mxu0 0.0
  %117 = vmatpush.msra.mxu0 0.0
  %118 = vmatpush.msra.mxu0 %v72
  %119 = vmatmul.f32.gmra.mxu0 %v58
  %v120 = vpop.f32.mrf.mxu0
  %v121 = vadd.f32 %v35, %v120
  %122 = vmatmul.f32.gmra.mxu0 %v61
  %v123 = vpop.f32.mrf.mxu0
  %v124 = vadd.f32 %v40, %v123
  %125 = vmatmul.f32.gmra.mxu0 %v64
  %v126 = vpop.f32.mrf.mxu0
  %v127 = vadd.f32 %v45, %v126
  %128 = vmatmul.f32.gmra.mxu0 %v67
  %v129 = vpop.f32.mrf.mxu0
  %v130 = vadd.f32 %v50, %v129
  %131 = vdwg.mxu0
  %v132 = vmul.f32 %v92, 0.5
  %v133 = vmul.f32 %v121, 0.5
  %v134 = vmul.f32 %v95, 0.5
  %v135 = vmul.f32 %v124, 0.5
  %v136 = vmul.f32 %v98, 0.5
  %v137 = vmul.f32 %v127, 0.5
  %v138 = vmul.f32 %v101, 0.5
  %v139 = vmul.f32 %v130, 0.5
  %v140 = vtanh.pop %v132
  %v141 = vtanh.pop %v133
  %v142 = vtanh.pop %v134
  %v143 = vtanh.pop %v135
  %v144 = vtanh.pop %v136
  %v145 = vtanh.pop %v137
  %v146 = vtanh.pop %v138
  %v147 = vtanh.pop %v139
  %v148 = vadd.f32 %v140, 1.0
  %v149 = vadd.f32 %v141, 1.0
  %v150 = vadd.f32 %v142, 1.0
  %v151 = vadd.f32 %v143, 1.0
  %v152 = vadd.f32 %v144, 1.0
  %v153 = vadd.f32 %v145, 1.0
  %v154 = vadd.f32 %v146, 1.0
  %v155 = vadd.f32 %v147, 1.0
  %v156 = vmul.f32 %v148, 0.5
  %v157 = vmul.f32 %v149, 0.5
  %v158 = vmul.f32 %v150, 0.5
  %v159 = vmul.f32 %v151, 0.5
  %v160 = vmul.f32 %v152, 0.5
  %v161 = vmul.f32 %v153, 0.5
  %v162 = vmul.f32 %v154, 0.5
  %v163 = vmul.f32 %v155, 0.5
  %v164 = vstv %s30
  %vm165 = vcmask 261120
  %v167 = vsel %vm165, %v29, 0
  %169 = vmatpush.msra.mxu0 0.0
  %170 = vmatpush.msra.mxu0 0.0
  %171 = vmatpush.msra.mxu0 0.0
  %172 = vmatpush.msra.mxu0 0.0
  %173 = vmatpush.msra.mxu0 0.0
  %174 = vmatpush.msra.mxu0 0.0
  %175 = vmatpush.msra.mxu0 0.0
  %176 = vmatpush.msra.mxu0 0.0
  %177 = vmatpush.msra.mxu0 0.0
  %178 = vmatpush.msra.mxu0 0.0
  %179 = vmatpush.msra.mxu0 0.0
  %180 = vmatpush.msra.mxu0 0.0
  %181 = vmatpush.msra.mxu0 %v162
  %182 = vmatpush.msra.mxu0 %v160
  %183 = vmatpush.msra.mxu0 %v158
  %184 = vmatpush.msra.mxu0 %v156
  %185 = vmatmul.f32.gmra.mxu0 %v167
  %v186 = vpop.f32.mrf.mxu0
  %v187 = vadd.f32 %v164, %v186
  %188 = vdwg.mxu0
  %189 = vmatpush.msra.mxu0 0.0
  %190 = vmatpush.msra.mxu0 0.0
  %191 = vmatpush.msra.mxu0 0.0
  %192 = vmatpush.msra.mxu0 0.0
  %193 = vmatpush.msra.mxu0 0.0
  %194 = vmatpush.msra.mxu0 0.0
  %195 = vmatpush.msra.mxu0 0.0
  %196 = vmatpush.msra.mxu0 0.0
  %197 = vmatpush.msra.mxu0 0.0
  %198 = vmatpush.msra.mxu0 0.0
  %199 = vmatpush.msra.mxu0 0.0
  %200 = vmatpush.msra.mxu0 0.0
  %201 = vmatpush.msra.mxu0 %v163
  %202 = vmatpush.msra.mxu0 %v161
  %203 = vmatpush.msra.mxu0 %v159
  %204 = vmatpush.msra.mxu0 %v157
  %205 = vmatmul.f32.gmra.mxu0 %v167
  %v206 = vpop.f32.mrf.mxu0
  %v207 = vadd.f32 %v164, %v206
  %208 = vdwg.mxu0
  %v211 = vrot.slane %v207, 7
  %vm212 = vcmask 1040384
  %v213 = vsel %vm212, %v187, %v211
  %v215 = vlaneseq
  %vm216 = vcmp.ge.s32.totalorder %v215, 0
  %vm217 = vcmp.lt.s32.totalorder %v215, 256
  %vm218 = vmand %vm216, %vm217
  %219 = vst.msk [vmem:[%s5] sm:$0x3] %vm218, %v213
  // Predicated region
  $region22: #{mlp_forward.1} parent=0 // pred_check
    _
  $region23: #{mlp_forward.1} parent=0 // pred_check_branch
    %221 = sbr.rel (0) target = $region25
  $region24: #{mlp_forward.1} parent=0 // pred_region
    _
  $region25: #{mlp_forward.1} parent=0 // pred_fallthru
    _
  // Predicated region
  $region26: #{mlp_forward.1} parent=0 // pred_check
    _
  $region27: #{mlp_forward.1} parent=0 // pred_check_branch
    %223 = sbr.rel (0) target = $region29
  $region28: #{mlp_forward.1} parent=0 // pred_region
    _
  $region29: #{mlp_forward.1} parent=0 // pred_fallthru
    _

</llo_original>
